<compile_context>
chip_gen: v7x
topology: tpu7x:2x2x1
jax: 0.10.0
libtpu: 0.0.40
codegen_flags: <defaults>
</compile_context>

<pallas_src>
import functools

import jax
import jax.numpy as jnp
from jax.experimental import pallas as pl
from jax.experimental.pallas import tpu as pltpu

LANES = 128
SUBLANES = 8


def _cdiv(a, b):
    return -(-a // b)


def _mse_kernel(x_ref, y_ref, o_ref, acc_ref, *, rows, tile_rows,
                steps_per_partial):
    c = pl.program_id(0)   # partial index (one per TensorCore on v7x)
    i = pl.program_id(1)   # reduction step within this partial

    @pl.when(i == 0)
    def _():
        acc_ref[...] = jnp.zeros_like(acc_ref)

    # Global rows covered by this (possibly clamped / boundary) block; rows at
    # or beyond `rows` are masked to zero so they contribute nothing.
    blk = c * steps_per_partial + i
    row_start = blk * tile_rows
    row_ids = row_start + jax.lax.broadcasted_iota(
        jnp.int32, (tile_rows, LANES), 0)

    d = x_ref[...].astype(jnp.float32) - y_ref[...].astype(jnp.float32)
    d = jnp.where(row_ids < rows, d, 0.0)
    sq = d * d

    # Fold into a vreg-shaped (8,128) accumulator with pure VPU adds; defer the
    # cross-lane/sublane reduction to the final step.
    acc_ref[...] += jnp.sum(
        sq.reshape(tile_rows // SUBLANES, SUBLANES, LANES), axis=0)

    @pl.when(i == steps_per_partial - 1)
    def _():
        o_ref[0, 0] = jnp.sum(acc_ref[...])


def mse_loss_pallas(x, y, *, tile_rows=2048, num_partials=2):
    """F.mse_loss(x, y) (mean reduction) via a Pallas TPU reduction kernel.

    tile_rows=2048 -> 1 MiB f32 blocks per input (2 inputs x 2 buffers = 4 MiB
    VMEM), safe on every generation including v5e's 16 MiB scoped default.
    num_partials=2 lets v7x split the HBM stream across both TensorCores; on
    single-TC chips it is just an extra (cheap) serial grid iteration.
    """
    assert x.shape == y.shape, "mse_loss requires matching shapes"
    n_elems = x.size

    xf = x.reshape(-1)
    yf = y.reshape(-1)

    # Kernel handles the largest prefix that forms whole (8, 128) row groups;
    # the (< 1024-element) remainder is added with a tiny wrapper-side term.
    rows = (n_elems // (SUBLANES * LANES)) * SUBLANES
    main = rows * LANES
    rem = n_elems - main

    total = jnp.float32(0.0)

    if rows > 0:
        tile_rows = max(SUBLANES, (int(tile_rows) // SUBLANES) * SUBLANES)
        tile_rows = min(tile_rows, rows)
        steps_total = _cdiv(rows, tile_rows)
        num_partials = max(1, min(int(num_partials), steps_total))
        steps_per_partial = _cdiv(steps_total, num_partials)
        max_blk = steps_total - 1

        def in_map(c, i):
            blk = c * steps_per_partial + i
            # Clamp over-range blocks back in bounds; the kernel masks them out.
            return (jnp.minimum(blk, max_blk), 0)

        x2 = xf[:main].reshape(rows, LANES)  # no-copy view when rem == 0
        y2 = yf[:main].reshape(rows, LANES)

        kernel = functools.partial(
            _mse_kernel, rows=rows, tile_rows=tile_rows,
            steps_per_partial=steps_per_partial)

        partials = pl.pallas_call(
            kernel,
            out_shape=jax.ShapeDtypeStruct((num_partials, 1), jnp.float32),
            grid=(num_partials, steps_per_partial),
            in_specs=[
                pl.BlockSpec((tile_rows, LANES), in_map),
                pl.BlockSpec((tile_rows, LANES), in_map),
            ],
            out_specs=pl.BlockSpec((1, 1), lambda c, i: (c, 0),
                                   memory_space=pltpu.SMEM),
            scratch_shapes=[pltpu.VMEM((SUBLANES, LANES), jnp.float32)],
            compiler_params=pltpu.CompilerParams(
                dimension_semantics=("parallel", "arbitrary")),
        )(x2, y2)
        total = total + jnp.sum(partials)

    if rem > 0:
        xt = xf[main:].astype(jnp.float32)
        yt = yf[main:].astype(jnp.float32)
        total = total + jnp.sum((xt - yt) ** 2)

    return (total / jnp.float32(n_elems)).astype(x.dtype)


if __name__ == "__main__":
    key = jax.random.PRNGKey(0)
    k1, k2, k3, k4 = jax.random.split(key, 4)

    # Primary: NCHW shape implied by the module's usage.
    shape = (2, 4, 16, 16)
    x = jax.random.normal(k1, shape, dtype=jnp.float32)
    y = jax.random.normal(k2, shape, dtype=jnp.float32)
    loss = mse_loss_pallas(x, y)
    jax.block_until_ready(loss)
    ref = jnp.mean((x - y) ** 2)
    assert jnp.allclose(loss, ref, rtol=1e-5, atol=1e-6), (loss, ref)

    # Secondary: non-aligned size exercising multi-step accumulation, two
    # partials, boundary-block masking and the wrapper-side remainder term.
    shape2 = (2, 3, 33, 40)
    x2 = jax.random.normal(k3, shape2, dtype=jnp.float32)
    y2 = jax.random.normal(k4, shape2, dtype=jnp.float32)
    loss2 = mse_loss_pallas(x2, y2, tile_rows=16, num_partials=2)
    jax.block_until_ready(loss2)
    ref2 = jnp.mean((x2 - y2) ** 2)
    assert jnp.allclose(loss2, ref2, rtol=1e-5, atol=1e-6), (loss2, ref2)

    print("KERNEL_OK")
</pallas_src>

<mosaic_0001>
module attributes {stable_mosaic.version = 11 : i64} {
  func.func @_mse_kernel(%arg0: i32, %arg1: i32, %arg2: memref<16x128xf32, #tpu.memory_space<vmem>>, %arg3: memref<16x128xf32, #tpu.memory_space<vmem>>, %arg4: memref<1x1xf32, #tpu.memory_space<smem>>, %arg5: memref<8x128xf32, #tpu.memory_space<vmem>>) attributes {dimension_semantics = [#tpu.dimension_semantics<parallel>, #tpu.dimension_semantics<arbitrary>], iteration_bounds = array<i64: 1, 1>, scalar_prefetch = 0 : i64, scratch_operands = 1 : i64, tpu.core_type = #tpu.core_type<tc>, window_params = [{transform_indices = @transform_0, window_bounds = array<i64: 16, 128>}, {transform_indices = @transform_1, window_bounds = array<i64: 16, 128>}, {transform_indices = @transform_2, window_bounds = array<i64: 1, 1>}]} {
    %c0_i32 = arith.constant 0 : i32
    %0 = arith.cmpi eq, %arg1, %c0_i32 : i32
    %1 = arith.extui %0 : i1 to i32
    %c0_i32_0 = arith.constant 0 : i32
    %2 = arith.cmpi ne, %1, %c0_i32_0 : i32
    scf.if %2 {
      %cst_12 = arith.constant 0.000000e+00 : f32
      %25 = vector.broadcast %cst_12 : f32 to vector<8x128xf32>
      %c0_13 = arith.constant 0 : index
      %c0_14 = arith.constant 0 : index
      %26 = vector.load %arg5[%c0_13, %c0_14] : memref<8x128xf32, #tpu.memory_space<vmem>>, vector<8x128xf32>
      tpu.vector_store %arg5[%c0_13, %c0_14], %25 {strides = array<i32>} : memref<8x128xf32, #tpu.memory_space<vmem>>, vector<8x128xf32>,
    } else {
    }
    %c1_i32 = arith.constant 1 : i32
    %3 = arith.muli %arg0, %c1_i32 : i32
    %4 = arith.addi %3, %arg1 : i32
    %c16_i32 = arith.constant 16 : i32
    %5 = arith.muli %4, %c16_i32 : i32
    %6 = tpu.iota {dimensions = array<i32: 0>} : vector<16x128xi32>
    %7 = vector.broadcast %5 : i32 to vector<16x128xi32>
    %8 = arith.addi %7, %6 : vector<16x128xi32>
    %c0 = arith.constant 0 : index
    %c0_1 = arith.constant 0 : index
    %9 = vector.load %arg2[%c0, %c0_1] : memref<16x128xf32, #tpu.memory_space<vmem>>, vector<16x128xf32>
    %c0_2 = arith.constant 0 : index
    %c0_3 = arith.constant 0 : index
    %10 = vector.load %arg3[%c0_2, %c0_3] : memref<16x128xf32, #tpu.memory_space<vmem>>, vector<16x128xf32>
    %11 = arith.subf %9, %10 : vector<16x128xf32>
    %c16_i32_4 = arith.constant 16 : i32
    %12 = vector.broadcast %c16_i32_4 : i32 to vector<16x128xi32>
    %13 = arith.cmpi slt, %8, %12 : vector<16x128xi32>
    %cst = arith.constant 0.000000e+00 : f32
    %14 = vector.broadcast %cst : f32 to vector<16x128xf32>
    %15 = arith.select %13, %11, %14 : vector<16x128xi1>, vector<16x128xf32>
    %16 = arith.mulf %15, %15 : vector<16x128xf32>
    %c0_5 = arith.constant 0 : index
    %c0_6 = arith.constant 0 : index
    %17 = vector.load %arg5[%c0_5, %c0_6] : memref<8x128xf32, #tpu.memory_space<vmem>>, vector<8x128xf32>
    %18 = vector.shape_cast %16 : vector<16x128xf32> to vector<2x8x128xf32>
    %cst_7 = arith.constant dense<0.000000e+00> : vector<8x128xf32>
    %19 = vector.multi_reduction <add>, %18, %cst_7 [0] : vector<2x8x128xf32> to vector<8x128xf32>
    %20 = arith.addf %17, %19 : vector<8x128xf32>
    %c0_8 = arith.constant 0 : index
    %c0_9 = arith.constant 0 : index
    %21 = vector.load %arg5[%c0_8, %c0_9] : memref<8x128xf32, #tpu.memory_space<vmem>>, vector<8x128xf32>
    tpu.vector_store %arg5[%c0_8, %c0_9], %20 {strides = array<i32>} : memref<8x128xf32, #tpu.memory_space<vmem>>, vector<8x128xf32>,
    %c0_i32_10 = arith.constant 0 : i32
    %22 = arith.cmpi eq, %arg1, %c0_i32_10 : i32
    %23 = arith.extui %22 : i1 to i32
    %c0_i32_11 = arith.constant 0 : i32
    %24 = arith.cmpi ne, %23, %c0_i32_11 : i32
    scf.if %24 {
      %c0_12 = arith.constant 0 : index
      %c0_13 = arith.constant 0 : index
      %25 = vector.load %arg5[%c0_12, %c0_13] : memref<8x128xf32, #tpu.memory_space<vmem>>, vector<8x128xf32>
      %26 = vector.shape_cast %25 : vector<8x128xf32> to vector<1x8x128xf32>
      %cst_14 = arith.constant dense<0.000000e+00> : vector<1xf32>
      %27 = vector.multi_reduction <add>, %26, %cst_14 [1, 2] : vector<1x8x128xf32> to vector<1xf32>
      %28 = vector.shape_cast %27 : vector<1xf32> to vector<1x1x1xf32>
      %29 = vector.extract %28[0, 0, 0] : f32 from vector<1x1x1xf32>
      %c0_15 = arith.constant 0 : index
      %c0_16 = arith.constant 0 : index
      %30 = memref.load %arg4[%c0_15, %c0_16] : memref<1x1xf32, #tpu.memory_space<smem>>
      memref.store %29, %arg4[%c0_15, %c0_16] : memref<1x1xf32, #tpu.memory_space<smem>>
    } else {
    }
    return
  }
  func.func @transform_0(%arg0: i32, %arg1: i32) -> (i32, i32) {
    %c1_i32 = arith.constant 1 : i32
    %0 = arith.muli %arg0, %c1_i32 : i32
    %1 = arith.addi %0, %arg1 : i32
    %c0_i32 = arith.constant 0 : i32
    %2 = arith.minsi %1, %c0_i32 : i32
    %c0_i32_0 = arith.constant 0 : i32
    %c0_i32_1 = arith.constant 0 : i32
    return %2, %c0_i32_0 : i32, i32
  }
  func.func @transform_1(%arg0: i32, %arg1: i32) -> (i32, i32) {
    %c1_i32 = arith.constant 1 : i32
    %0 = arith.muli %arg0, %c1_i32 : i32
    %1 = arith.addi %0, %arg1 : i32
    %c0_i32 = arith.constant 0 : i32
    %2 = arith.minsi %1, %c0_i32 : i32
    %c0_i32_0 = arith.constant 0 : i32
    %c0_i32_1 = arith.constant 0 : i32
    return %2, %c0_i32_0 : i32, i32
  }
  func.func @transform_2(%arg0: i32, %arg1: i32) -> (i32, i32) {
    %c0_i32 = arith.constant 0 : i32
    %c0_i32_0 = arith.constant 0 : i32
    return %arg0, %c0_i32 : i32, i32
  }
}

</mosaic_0001>

<llo_original>
// kernel: tpu_custom_call.1
$region0: #{tpu_custom_call.1}
  #allocation0 [shape = 'u32[]', space=smem, size = 0x4, offset = 0x4, fixed_abs, tag = 'smem constant byte address 0x4 - core index']
  #allocation1 [shape = 'u32[144,128]{1,0:T(1,128)}', space=vmem, size = 0x12000, scoped, tag = 'internal scratch']
  #allocation2 [shape = 'f32[8,128]{1,0:T(8,128)}', space=vmem, size = 0x1000, scoped, tag = 'scratch operand']
  %s0 = inlined_call_operand.hbm [shape: f32[16,128], index: 0, kind: input, shape index: {}]
  %s1 = inlined_call_operand.hbm [shape: f32[16,128], index: 1, kind: input, shape index: {}]
  %s2 = inlined_call_operand.hbm [shape: f32[1,1], index: 2, kind: output, shape index: {}]
  %s3 = sld [smem:[#allocation0]]
  $region34: #{tpu_custom_call.1} parent=0
    _
  %s5 = ssub.s32 1, %s3
  %s6 = scalar_select 0, %s5, %s3
  $region1: #{tpu_custom_call.1} parent=0
    #allocation3 [shape = 'u8[8192]{0}', space=vmem, size = 0x2000, scoped, tag = 'input window, operand 0, single buffered']
    #allocation4 [shape = 's32[1]{0}', space=sflag, size = 0x4, scoped, tag = 'scoped memory for tpu_custom_call.1']
    #allocation5 [shape = 's32[1]{0}', space=sflag, size = 0x4, scoped, tag = 'scoped memory for tpu_custom_call.1']
    #allocation6 [shape = 'u8[8192]{0}', space=vmem, size = 0x2000, scoped, tag = 'input window, operand 1, single buffered']
    #allocation7 [shape = 's32[1]{0}', space=sflag, size = 0x4, scoped, tag = 'scoped memory for tpu_custom_call.1']
    #allocation8 [shape = 'u8[512]{0}', space=smem, size = 0x200, scoped, tag = 'output window, operand 0, single buffered']
    %7 = vsyncpa [#allocation4], 0
    %8 = vsyncpa [#allocation7], 0
    %9 = vsyncpa [#allocation5], 0
    // Predicated region
    $region2: #{tpu_custom_call.1} parent=1 // pred_check
      _
    $region3: #{tpu_custom_call.1} parent=1 // pred_check_branch
      %11 = sbr.rel (0) target = $region5
    $region4: #{tpu_custom_call.1} parent=1 // pred_region
      %s12 = sadd.s32 0, 0
      %p13 = scmp.lt.s32.totalorder %s12, 0
      %s14 = scalar_select %p13, %s12, 0
      %s15 = smul.u32 2, %s14
      %s17 = ssub.s32 256, 256
      %18 = vsyncadd [#allocation4], %s17
      %s19 = smul.addr %s15, 128
      %s20 = scalar_lea.hbm %s0, %s19
      %s21 = sshll.u32 [#allocation3], 4
      %s22 = int_to_ptr.vmem [resolvable:$true] %s21
      %27 = dma.hbm_to_vmem [thread:$0]  %s20, 256, %s22, [#allocation4], 128, 128, 8
    $region5: #{tpu_custom_call.1} parent=1 // pred_fallthru
      _
    // Predicated region
    $region6: #{tpu_custom_call.1} parent=1 // pred_check
      _
    $region7: #{tpu_custom_call.1} parent=1 // pred_check_branch
      %29 = sbr.rel (0) target = $region9
    $region8: #{tpu_custom_call.1} parent=1 // pred_region
      %s30 = sadd.s32 0, 0
      %p31 = scmp.lt.s32.totalorder %s30, 0
      %s32 = scalar_select %p31, %s30, 0
      %s33 = smul.u32 2, %s32
      %s35 = ssub.s32 256, 256
      %36 = vsyncadd [#allocation7], %s35
      %s37 = smul.addr %s33, 128
      %s38 = scalar_lea.hbm %s1, %s37
      %s39 = sshll.u32 [#allocation6], 4
      %s40 = int_to_ptr.vmem [resolvable:$true] %s39
      %45 = dma.hbm_to_vmem [thread:$0]  %s38, 256, %s40, [#allocation7], 128, 128, 8
    $region9: #{tpu_custom_call.1} parent=1 // pred_fallthru
      _
    // Predicated region
    $region10: #{tpu_custom_call.1} parent=1 // pred_check
      _
    $region11: #{tpu_custom_call.1} parent=1 // pred_check_branch
      %47 = sbr.rel (0) target = $region13
    $region12: #{tpu_custom_call.1} parent=1 // pred_region
      %48 = dma.done [#allocation4], 256
    $region13: #{tpu_custom_call.1} parent=1 // pred_fallthru
      _
    // Predicated region
    $region14: #{tpu_custom_call.1} parent=1 // pred_check
      _
    $region15: #{tpu_custom_call.1} parent=1 // pred_check_branch
      %50 = sbr.rel (0) target = $region17
    $region16: #{tpu_custom_call.1} parent=1 // pred_region
      %51 = dma.done [#allocation7], 256
    $region17: #{tpu_custom_call.1} parent=1 // pred_fallthru
      _
    %s52 = sadd.s32 0, 0
    %p53 = scmp.lt.s32.totalorder %s52, 0
    %s54 = scalar_select %p53, %s52, 0
    %s55 = smul.u32 2, %s54
    %s56 = sadd.s32 0, 0
    %p57 = scmp.lt.s32.totalorder %s56, 0
    %s58 = scalar_select %p57, %s56, 0
    %s59 = smul.u32 2, %s58
    %p60 = scmp.eq.s32.totalorder 0, 0
    // Predicated region
    $region18: #{tpu_custom_call.1} parent=1 // pred_check
      %p61 = pneg %p60
    $region19: #{tpu_custom_call.1} parent=1 // pred_check_branch
      %63 = sbr.rel (%p61) target = $region21
    $region20: #{tpu_custom_call.1} parent=1 // pred_region
      %64 = vst [vmem:[#allocation2] sm:$0xff] 0.0
    $region21: #{tpu_custom_call.1} parent=1 // pred_fallthru
      _
    %s65 = sadd.s32 0, 0
    %s66 = smul.u32 %s65, 16
    %v67 = vlaneseq
    %v68 = vshrl.u32 %v67, 7
    %v69 = vadd.s32 %v68, 8
    %v70 = vstv %s66
    %v71 = vadd.s32 %v70, %v68
    %v72 = vadd.s32 %v70, %v69
    %v73 = vld [vmem:[#allocation3] sm:$0xff]
    %v74 = vld [vmem:[#allocation3 + $0x8] sm:$0xff]
    %v75 = vld [vmem:[#allocation6] sm:$0xff]
    %v76 = vld [vmem:[#allocation6 + $0x8] sm:$0xff]
    %v77 = vsub.f32 %v73, %v75
    %v78 = vsub.f32 %v74, %v76
    %vm79 = vcmp.lt.s32.totalorder %v71, 16
    %vm80 = vcmp.lt.s32.totalorder %v72, 16
    %v81 = vsel %vm79, %v77, 0.0
    %v82 = vsel %vm80, %v78, 0.0
    %v83 = vmul.f32 %v81, %v81
    %v84 = vmul.f32 %v82, %v82
    %v85 = vld [vmem:[#allocation2] sm:$0xff]
    %v86 = vadd.f32 %v83, %v84
    %v87 = vadd.f32 %v85, %v86
    %88 = vst [vmem:[#allocation2] sm:$0xff] %v87
    // Predicated region
    $region22: #{tpu_custom_call.1} parent=1 // pred_check
      %p89 = pneg %p60
    $region23: #{tpu_custom_call.1} parent=1 // pred_check_branch
      %91 = sbr.rel (%p89) target = $region25
    $region24: #{tpu_custom_call.1} parent=1 // pred_region
      %v92 = vld [vmem:[#allocation2] sm:$0xff]
      %93 = vadd.xlane.f32.xlu0 %v92
      %v94 = vpop.xlane.xlu0 %93
      %v95 = vrot.slane %v94, 4
      %v96 = vadd.f32 %v94, %v95
      %v97 = vrot.slane %v96, 2
      %v98 = vadd.f32 %v96, %v97
      %v99 = vrot.slane %v98, 1
      %v100 = vadd.f32 %v98, %v99
      %s101 = vtos %v100
      %s102 = scalar_lea.smem [#allocation8], 0
      %103 = sst [smem:[%s102]] %s101
    $region25: #{tpu_custom_call.1} parent=1 // pred_fallthru
      _
    // Predicated region
    $region26: #{tpu_custom_call.1} parent=1 // pred_check
      _
    $region27: #{tpu_custom_call.1} parent=1 // pred_check_branch
      %105 = sbr.rel (0) target = $region29
    $region28: #{tpu_custom_call.1} parent=1 // pred_region
      %s107 = ssub.s32 16, 16
      %108 = vsyncadd [#allocation5], %s107
      %111 = dma.smem_to_hbm [#allocation8], 16, %s2, [#allocation5]
    $region29: #{tpu_custom_call.1} parent=1 // pred_fallthru
      _
    // Predicated region
    $region30: #{tpu_custom_call.1} parent=1 // pred_check
      _
    $region31: #{tpu_custom_call.1} parent=1 // pred_check_branch
      %113 = sbr.rel (0) target = $region33
    $region32: #{tpu_custom_call.1} parent=1 // pred_region
      %114 = dma.done [#allocation5], 16
    $region33: #{tpu_custom_call.1} parent=1 // pred_fallthru
      _
    %115 = sfence
    %116 = vsyncpa [#allocation4], 1
    %117 = vsyncpa [#allocation7], 1
    %118 = vsyncpa [#allocation5], 1

</llo_original>
